<compile_context>
chip_gen: v6e
topology: v6e:2x2x1
jax: 0.10.0
libtpu: 0.0.40
codegen_flags: <defaults>
</compile_context>

<pallas_src>
import functools
import math

import jax
import jax.numpy as jnp
from jax import lax
from jax.experimental import pallas as pl
from jax.experimental.pallas import tpu as pltpu

EPS = 1e-5


# ----------------------------------------------------------------------------
# Wrapper-side, one-time weight preprocessing
# ----------------------------------------------------------------------------
def _band_weight(w_hwio, w_sp):
    """Fold the 3 dx taps + channel mixing of a 3x3 conv into a block-banded
    [3*W*Cin, W*Cout] matrix (dy-tap major along K).  Zero off-band blocks
    implement the zero-padding along W."""
    kh, kw, cin, cout = w_hwio.shape
    wi = jnp.arange(w_sp)[:, None]          # input column block
    wo = jnp.arange(w_sp)[None, :]          # output column block
    dx = wi - wo + 1
    valid = (dx >= 0) & (dx < kw)
    blocks = w_hwio[:, jnp.clip(dx, 0, kw - 1)]                  # [kh, W, W, Cin, Cout]
    blocks = jnp.where(valid[None, :, :, None, None], blocks, 0.0)
    b = jnp.transpose(blocks, (0, 1, 3, 2, 4))                   # [kh, W, Cin, W, Cout]
    return b.reshape(kh * w_sp * cin, w_sp * cout)


# ----------------------------------------------------------------------------
# In-kernel helpers
# ----------------------------------------------------------------------------
def _conv3x3_banded(a, w_ref, height):
    """3x3 conv (padding=1, stride=1) of image rows held lane-dense [rows, W*C].

    dy taps: pltpu.roll along the row (sublane) axis + image-boundary masks.
    dx taps + channel mixing: three accumulated MXU dots (K = W*C each) against
    the dy-split block-banded weight.  bf16 operands, f32 accumulation.
    """
    rows, wc = a.shape
    row = lax.broadcasted_iota(jnp.int32, (rows, wc), 0)
    not_top = (row % height) != 0             # rows with a valid y-1 neighbour
    not_bot = (row % height) != (height - 1)  # rows with a valid y+1 neighbour
    # Roll + mask in f32 (safe on v5e's f32-only VPU), cast to bf16 after.
    # On v6e/v7x the cast could be hoisted before the roll to halve VPU work.
    up = jnp.where(not_top, pltpu.roll(a, 1, axis=0), 0.0).astype(jnp.bfloat16)
    dn = jnp.where(not_bot, pltpu.roll(a, rows - 1, axis=0), 0.0).astype(jnp.bfloat16)
    mid = a.astype(jnp.bfloat16)
    y = jnp.dot(up, w_ref[0:wc, :], preferred_element_type=jnp.float32)
    y = y + jnp.dot(mid, w_ref[wc:2 * wc, :], preferred_element_type=jnp.float32)
    y = y + jnp.dot(dn, w_ref[2 * wc:3 * wc, :], preferred_element_type=jnp.float32)
    return y


def _stats_block(y):
    """Per-lane sum / sum-of-squares partials packed into an (8, WC) block."""
    wc = y.shape[1]
    ssum = jnp.sum(y, axis=0, keepdims=True)
    ssq = jnp.sum(y * y, axis=0, keepdims=True)
    return jnp.concatenate([ssum, ssq, jnp.zeros((6, wc), jnp.float32)], axis=0)


# ----------------------------------------------------------------------------
# Kernels (one grid step = one image strip, grid axis is "parallel")
# ----------------------------------------------------------------------------
def conv1_kernel(x_ref, w_ref, y_ref, s_ref, *, height):
    y = _conv3x3_banded(x_ref[...], w_ref, height)
    y_ref[...] = y
    s_ref[0] = _stats_block(y)


def bn_relu_conv2_kernel(y1_ref, sc_ref, sh_ref, w_ref, y_ref, s_ref, *, height):
    h = jnp.maximum(y1_ref[...] * sc_ref[...] + sh_ref[...], 0.0)
    y = _conv3x3_banded(h, w_ref, height)
    y_ref[...] = y
    s_ref[0] = _stats_block(y)


def bn_residual_relu_kernel(y2_ref, sc_ref, sh_ref, x_ref, o_ref):
    o_ref[...] = jnp.maximum(
        y2_ref[...] * sc_ref[...] + sh_ref[...] + x_ref[...], 0.0)


# ----------------------------------------------------------------------------
# Wrapper
# ----------------------------------------------------------------------------
def _bn_scale_shift(stats, gamma, beta, count, w, c):
    """Tiny cross-tile reduction of BN partials -> per-lane scale/shift."""
    ssum = stats[:, 0, :].sum(axis=0).reshape(w, c).sum(axis=0)   # [C]
    ssq = stats[:, 1, :].sum(axis=0).reshape(w, c).sum(axis=0)    # [C]
    mean = ssum / count
    # TODO(synk): switch to a shifted/Welford variance for large-mean activations.
    var = jnp.maximum(ssq / count - mean * mean, 0.0)
    scale = gamma.astype(jnp.float32) * lax.rsqrt(var + EPS)
    shift = beta.astype(jnp.float32) - mean * scale
    return (jnp.tile(scale, w)[None, :].astype(jnp.float32),
            jnp.tile(shift, w)[None, :].astype(jnp.float32))


def basic_block(x_nchw, w1_oihw, g1, b1, w2_oihw, g2, b2, *, images_per_tile=1):
    """NCHW in / NCHW out, matching PyTorch BasicBlock (stride=1, no downsample)."""
    n, c, h, w = x_nchw.shape
    cout = w1_oihw.shape[0]
    assert cout == c, "stride=1 / no-downsample BasicBlock requires planes == inplanes"
    assert n % images_per_tile == 0
    wc = w * c
    num_tiles = n // images_per_tile
    rows = images_per_tile * h
    count = n * h * w                       # BN divisor (biased batch stats)

    # --- one-time parameter preprocessing (cache across calls in a real model)
    bw1 = _band_weight(jnp.transpose(w1_oihw, (2, 3, 1, 0)), w).astype(jnp.bfloat16)
    bw2 = _band_weight(jnp.transpose(w2_oihw, (2, 3, 1, 0)), w).astype(jnp.bfloat16)

    # --- layout: NCHW -> lane-dense [N*H, W*C]; in a real network activations
    #     stay in this folded layout across blocks (edge transposes are only
    #     here to match the PyTorch NCHW interface).
    # TODO(synk): carry the slabs in bf16 in HBM at real ResNet sizes.
    x2d = jnp.transpose(x_nchw, (0, 2, 3, 1)).reshape(n * h, wc).astype(jnp.float32)

    act_spec = pl.BlockSpec((rows, wc), lambda i: (i, 0))         # streamed strips
    wgt_spec = pl.BlockSpec((3 * wc, wc), lambda i: (0, 0))       # resident weights
    vec_spec = pl.BlockSpec((1, wc), lambda i: (0, 0))            # resident BN vecs
    stats_spec = pl.BlockSpec((1, 8, wc), lambda i: (i, 0, 0))

    act_bytes = rows * wc * 4
    wgt_bytes = 3 * wc * wc * 2
    vmem_limit = min(64 << 20, max(16 << 20, 2 * (4 * act_bytes + wgt_bytes) + (4 << 20)))
    cparams = pltpu.CompilerParams(
        dimension_semantics=("parallel",),
        vmem_limit_bytes=vmem_limit,
    )

    act_out = jax.ShapeDtypeStruct((n * h, wc), jnp.float32)
    stats_out = jax.ShapeDtypeStruct((num_tiles, 8, wc), jnp.float32)

    # Pass 1: conv1 + BN1 partial stats
    y1_raw, s1 = pl.pallas_call(
        functools.partial(conv1_kernel, height=h),
        grid=(num_tiles,),
        in_specs=[act_spec, wgt_spec],
        out_specs=(act_spec, stats_spec),
        out_shape=(act_out, stats_out),
        compiler_params=cparams,
    )(x2d, bw1)

    sc1, sh1 = _bn_scale_shift(s1, g1, b1, count, w, cout)

    # Pass 2: bn1 + relu + conv2 + BN2 partial stats
    y2_raw, s2 = pl.pallas_call(
        functools.partial(bn_relu_conv2_kernel, height=h),
        grid=(num_tiles,),
        in_specs=[act_spec, vec_spec, vec_spec, wgt_spec],
        out_specs=(act_spec, stats_spec),
        out_shape=(act_out, stats_out),
        compiler_params=cparams,
    )(y1_raw, sc1, sh1, bw2)

    sc2, sh2 = _bn_scale_shift(s2, g2, b2, count, w, cout)

    # Pass 3: bn2 + residual add + relu
    out2d = pl.pallas_call(
        bn_residual_relu_kernel,
        grid=(num_tiles,),
        in_specs=[act_spec, vec_spec, vec_spec, act_spec],
        out_specs=act_spec,
        out_shape=act_out,
        compiler_params=pltpu.CompilerParams(dimension_semantics=("parallel",)),
    )(y2_raw, sc2, sh2, x2d)

    return jnp.transpose(out2d.reshape(n, h, w, cout), (0, 3, 1, 2))


# ----------------------------------------------------------------------------
# Pure-JAX reference (mirrors the PyTorch forward, train-mode BN)
# ----------------------------------------------------------------------------
def reference_forward(x, w1_oihw, g1, b1, w2_oihw, g2, b2):
    def conv(x, w):
        return jax.lax.conv_general_dilated(
            x, w, window_strides=(1, 1), padding=((1, 1), (1, 1)),
            dimension_numbers=('NCHW', 'OIHW', 'NCHW'))

    def bn(y, g, b):
        mean = jnp.mean(y, axis=(0, 2, 3), keepdims=True)
        var = jnp.mean((y - mean) ** 2, axis=(0, 2, 3), keepdims=True)
        return ((y - mean) * jax.lax.rsqrt(var + EPS)
                * g[None, :, None, None] + b[None, :, None, None])

    out = jax.nn.relu(bn(conv(x, w1_oihw), g1, b1))
    out = bn(conv(out, w2_oihw), g2, b2) + x
    return jax.nn.relu(out)


if __name__ == "__main__":
    # Small shapes consistent with BasicBlock(inplanes=8, planes=8, stride=1);
    # W * C = 16 * 8 = 128 lanes (lane-dense).
    N, C, H, W = 2, 8, 16, 16
    inplanes = planes = C

    key = jax.random.PRNGKey(0)
    kx, kw1, kw2, kg1, kb1, kg2, kb2 = jax.random.split(key, 7)

    x = jax.random.normal(kx, (N, C, H, W), jnp.float32)

    fan1 = inplanes * 3 * 3
    fan2 = planes * 3 * 3
    w1_oihw = jax.random.normal(kw1, (planes, inplanes, 3, 3), jnp.float32) * math.sqrt(2.0 / fan1)
    w2_oihw = jax.random.normal(kw2, (planes, planes, 3, 3), jnp.float32) * math.sqrt(2.0 / fan2)
    g1 = 1.0 + 0.1 * jax.random.normal(kg1, (planes,), jnp.float32)
    b1 = 0.1 * jax.random.normal(kb1, (planes,), jnp.float32)
    g2 = 1.0 + 0.1 * jax.random.normal(kg2, (planes,), jnp.float32)
    b2 = 0.1 * jax.random.normal(kb2, (planes,), jnp.float32)

    out = basic_block(x, w1_oihw, g1, b1, w2_oihw, g2, b2)
    out = jax.block_until_ready(out)

    ref = reference_forward(x, w1_oihw, g1, b1, w2_oihw, g2, b2)
    ref = jax.block_until_ready(ref)

    assert out.shape == (N, planes, H, W)
    # bf16 MXU operands (f32 accumulation) -> tolerance relaxed vs the f32 reference.
    assert jnp.allclose(out, ref, atol=5e-2, rtol=5e-2), \
        f"max abs err = {jnp.max(jnp.abs(out - ref))}"

    print("KERNEL_OK")
</pallas_src>

<mosaic_0001>
module attributes {stable_mosaic.version = 11 : i64} {
  func.func @conv1_kernel(%arg0: i32, %arg1: memref<16x128xf32, #tpu.memory_space<vmem>>, %arg2: memref<384x128xbf16, #tpu.memory_space<vmem>>, %arg3: memref<16x128xf32, #tpu.memory_space<vmem>>, %arg4: memref<1x8x128xf32, #tpu.memory_space<vmem>>) attributes {dimension_semantics = [#tpu.dimension_semantics<parallel>], iteration_bounds = array<i64: 2>, scalar_prefetch = 0 : i64, scratch_operands = 0 : i64, tpu.core_type = #tpu.core_type<tc>, window_params = [{transform_indices = @transform_0, window_bounds = array<i64: 16, 128>}, {pipeline_mode = #tpu.pipeline_mode<synchronous>, transform_indices = @transform_1, window_bounds = array<i64: 384, 128>}, {transform_indices = @transform_2, window_bounds = array<i64: 16, 128>}, {transform_indices = @transform_3, window_bounds = array<i64: 1, 8, 128>}]} {
    %c0 = arith.constant 0 : index
    %c0_0 = arith.constant 0 : index
    %0 = vector.load %arg1[%c0, %c0_0] : memref<16x128xf32, #tpu.memory_space<vmem>>, vector<16x128xf32>
    %1 = tpu.iota {dimensions = array<i32: 0>} : vector<16x128xi32>
    %c16_i32 = arith.constant 16 : i32
    %c0_i32 = arith.constant 0 : i32
    %2 = arith.cmpi eq, %c16_i32, %c0_i32 : i32
    %c1_i32 = arith.constant 1 : i32
    %3 = arith.select %2, %c1_i32, %c16_i32 : i32
    %4 = vector.broadcast %3 : i32 to vector<16x128xi32>
    %5 = arith.remsi %1, %4 : vector<16x128xi32>
    %c0_i32_1 = arith.constant 0 : i32
    %6 = vector.broadcast %c0_i32_1 : i32 to vector<16x128xi32>
    %7 = arith.cmpi ne, %5, %6 : vector<16x128xi32>
    %c0_i32_2 = arith.constant 0 : i32
    %8 = vector.broadcast %c0_i32_2 : i32 to vector<16x128xi32>
    %9 = arith.cmpi slt, %5, %8 : vector<16x128xi32>
    %c0_i32_3 = arith.constant 0 : i32
    %10 = arith.cmpi slt, %3, %c0_i32_3 : i32
    %11 = vector.broadcast %10 : i1 to vector<16x128xi1>
    %12 = vector.broadcast %11 : vector<16x128xi1> to vector<16x128xi1>
    %13 = arith.xori %9, %12 : vector<16x128xi1>
    %14 = arith.andi %13, %7 : vector<16x128xi1>
    %15 = vector.broadcast %3 : i32 to vector<16x128xi32>
    %16 = arith.addi %5, %15 : vector<16x128xi32>
    %17 = arith.select %14, %16, %5 : vector<16x128xi1>, vector<16x128xi32>
    %c0_i32_4 = arith.constant 0 : i32
    %18 = vector.broadcast %c0_i32_4 : i32 to vector<16x128xi32>
    %19 = arith.cmpi ne, %17, %18 : vector<16x128xi32>
    %c16_i32_5 = arith.constant 16 : i32
    %c0_i32_6 = arith.constant 0 : i32
    %20 = arith.cmpi eq, %c16_i32_5, %c0_i32_6 : i32
    %c1_i32_7 = arith.constant 1 : i32
    %21 = arith.select %20, %c1_i32_7, %c16_i32_5 : i32
    %22 = vector.broadcast %21 : i32 to vector<16x128xi32>
    %23 = arith.remsi %1, %22 : vector<16x128xi32>
    %c0_i32_8 = arith.constant 0 : i32
    %24 = vector.broadcast %c0_i32_8 : i32 to vector<16x128xi32>
    %25 = arith.cmpi ne, %23, %24 : vector<16x128xi32>
    %c0_i32_9 = arith.constant 0 : i32
    %26 = vector.broadcast %c0_i32_9 : i32 to vector<16x128xi32>
    %27 = arith.cmpi slt, %23, %26 : vector<16x128xi32>
    %c0_i32_10 = arith.constant 0 : i32
    %28 = arith.cmpi slt, %21, %c0_i32_10 : i32
    %29 = vector.broadcast %28 : i1 to vector<16x128xi1>
    %30 = vector.broadcast %29 : vector<16x128xi1> to vector<16x128xi1>
    %31 = arith.xori %27, %30 : vector<16x128xi1>
    %32 = arith.andi %31, %25 : vector<16x128xi1>
    %33 = vector.broadcast %21 : i32 to vector<16x128xi32>
    %34 = arith.addi %23, %33 : vector<16x128xi32>
    %35 = arith.select %32, %34, %23 : vector<16x128xi1>, vector<16x128xi32>
    %c15_i32 = arith.constant 15 : i32
    %36 = vector.broadcast %c15_i32 : i32 to vector<16x128xi32>
    %37 = arith.cmpi ne, %35, %36 : vector<16x128xi32>
    %c1_i32_11 = arith.constant 1 : i32
    %38 = tpu.dynamic_rotate %0 by %c1_i32_11 dim 0 : vector<16x128xf32>, i32 -> vector<16x128xf32>
    %cst = arith.constant 0.000000e+00 : f32
    %39 = vector.broadcast %cst : f32 to vector<16x128xf32>
    %40 = arith.select %19, %38, %39 : vector<16x128xi1>, vector<16x128xf32>
    %41 = arith.truncf %40 : vector<16x128xf32> to vector<16x128xbf16>
    %c15_i32_12 = arith.constant 15 : i32
    %42 = tpu.dynamic_rotate %0 by %c15_i32_12 dim 0 : vector<16x128xf32>, i32 -> vector<16x128xf32>
    %cst_13 = arith.constant 0.000000e+00 : f32
    %43 = vector.broadcast %cst_13 : f32 to vector<16x128xf32>
    %44 = arith.select %37, %42, %43 : vector<16x128xi1>, vector<16x128xf32>
    %45 = arith.truncf %44 : vector<16x128xf32> to vector<16x128xbf16>
    %46 = arith.truncf %0 : vector<16x128xf32> to vector<16x128xbf16>
    %c0_14 = arith.constant 0 : index
    %c0_15 = arith.constant 0 : index
    %47 = vector.load %arg2[%c0_14, %c0_15] : memref<384x128xbf16, #tpu.memory_space<vmem>>, vector<128x128xbf16>
    %cst_16 = arith.constant dense<0.000000e+00> : vector<16x128xf32>
    %48 = tpu.matmul %41, %47, %cst_16 {dimension_numbers = #tpu.dot_dimension_numbers<[1], [0], [0], [1], [0, 0, 1, 1], [], []>} : vector<16x128xbf16>, vector<128x128xbf16>, vector<16x128xf32> -> vector<16x128xf32>
    %c128 = arith.constant 128 : index
    %c0_17 = arith.constant 0 : index
    %49 = vector.load %arg2[%c128, %c0_17] : memref<384x128xbf16, #tpu.memory_space<vmem>>, vector<128x128xbf16>
    %cst_18 = arith.constant dense<0.000000e+00> : vector<16x128xf32>
    %50 = tpu.matmul %46, %49, %cst_18 {dimension_numbers = #tpu.dot_dimension_numbers<[1], [0], [0], [1], [0, 0, 1, 1], [], []>} : vector<16x128xbf16>, vector<128x128xbf16>, vector<16x128xf32> -> vector<16x128xf32>
    %51 = arith.addf %48, %50 : vector<16x128xf32>
    %c256 = arith.constant 256 : index
    %c0_19 = arith.constant 0 : index
    %52 = vector.load %arg2[%c256, %c0_19] : memref<384x128xbf16, #tpu.memory_space<vmem>>, vector<128x128xbf16>
    %cst_20 = arith.constant dense<0.000000e+00> : vector<16x128xf32>
    %53 = tpu.matmul %45, %52, %cst_20 {dimension_numbers = #tpu.dot_dimension_numbers<[1], [0], [0], [1], [0, 0, 1, 1], [], []>} : vector<16x128xbf16>, vector<128x128xbf16>, vector<16x128xf32> -> vector<16x128xf32>
    %54 = arith.addf %51, %53 : vector<16x128xf32>
    %c0_21 = arith.constant 0 : index
    %c0_22 = arith.constant 0 : index
    %55 = vector.load %arg3[%c0_21, %c0_22] : memref<16x128xf32, #tpu.memory_space<vmem>>, vector<16x128xf32>
    tpu.vector_store %arg3[%c0_21, %c0_22], %54 {strides = array<i32>} : memref<16x128xf32, #tpu.memory_space<vmem>>, vector<16x128xf32>,
    %cst_23 = arith.constant dense<0.000000e+00> : vector<128xf32>
    %56 = vector.multi_reduction <add>, %54, %cst_23 [0] : vector<16x128xf32> to vector<128xf32>
    %57 = vector.shape_cast %56 : vector<128xf32> to vector<1x128xf32>
    %58 = arith.mulf %54, %54 : vector<16x128xf32>
    %cst_24 = arith.constant dense<0.000000e+00> : vector<128xf32>
    %59 = vector.multi_reduction <add>, %58, %cst_24 [0] : vector<16x128xf32> to vector<128xf32>
    %60 = vector.shape_cast %59 : vector<128xf32> to vector<1x128xf32>
    %cst_25 = arith.constant 0.000000e+00 : f32
    %61 = vector.broadcast %cst_25 : f32 to vector<6x128xf32>
    %62 = tpu.concatenate %57, %60, %61 in 0 : vector<1x128xf32>, vector<1x128xf32>, vector<6x128xf32> -> vector<8x128xf32>
    %c0_26 = arith.constant 0 : index
    %c0_27 = arith.constant 0 : index
    %c0_28 = arith.constant 0 : index
    %63 = vector.load %arg4[%c0_26, %c0_27, %c0_28] : memref<1x8x128xf32, #tpu.memory_space<vmem>>, vector<1x8x128xf32>
    %64 = vector.shape_cast %63 : vector<1x8x128xf32> to vector<8x128xf32>
    %65 = vector.shape_cast %62 : vector<8x128xf32> to vector<1x8x128xf32>
    tpu.vector_store %arg4[%c0_26, %c0_27, %c0_28], %65 {strides = array<i32>} : memref<1x8x128xf32, #tpu.memory_space<vmem>>, vector<1x8x128xf32>,
    return
  }
  func.func @transform_0(%arg0: i32) -> (i32, i32) {
    %c0_i32 = arith.constant 0 : i32
    %c0_i32_0 = arith.constant 0 : i32
    return %arg0, %c0_i32 : i32, i32
  }
  func.func @transform_1(%arg0: i32) -> (i32, i32) {
    %c0_i32 = arith.constant 0 : i32
    %c0_i32_0 = arith.constant 0 : i32
    %c0_i32_1 = arith.constant 0 : i32
    return %c0_i32, %c0_i32_0 : i32, i32
  }
  func.func @transform_2(%arg0: i32) -> (i32, i32) {
    %c0_i32 = arith.constant 0 : i32
    %c0_i32_0 = arith.constant 0 : i32
    return %arg0, %c0_i32 : i32, i32
  }
  func.func @transform_3(%arg0: i32) -> (i32, i32, i32) {
    %c0_i32 = arith.constant 0 : i32
    %c0_i32_0 = arith.constant 0 : i32
    %c0_i32_1 = arith.constant 0 : i32
    return %arg0, %c0_i32, %c0_i32_0 : i32, i32, i32
  }
}

</mosaic_0001>

<llo_original>
// kernel: tpu_custom_call.1
$region0: #{tpu_custom_call.1}
  #allocation0 [shape = 'u32[]', space=smem, size = 0x4, offset = 0x4, fixed_abs, tag = 'smem constant byte address 0x4 - core index']
  #allocation1 [shape = 'u32[144,128]{1,0:T(1,128)}', space=vmem, size = 0x12000, scoped, tag = 'internal scratch']
  %s0 = inlined_call_operand.hbm [shape: f32[32,128], index: 0, kind: input, shape index: {}]
  %s1 = inlined_call_operand.hbm [shape: bf16[384,128], index: 1, kind: input, shape index: {}]
  %s2 = inlined_call_operand.hbm [shape: f32[32,128], index: 2, kind: output, shape index: {0}]
  %s3 = inlined_call_operand.hbm [shape: f32[2,8,128], index: 3, kind: output, shape index: {1}]
  %4 = xla_tuple %s2, %s3
  %s5 = sld [smem:[#allocation0]]
  $region57: #{tpu_custom_call.1} parent=0
    _
  %s7 = ssub.s32 1, %s5
  %s8 = scalar_select 0, %s7, %s5
  $region1: #{tpu_custom_call.1} parent=0
    #allocation2 [shape = 'u8[16384]{0}', space=vmem, size = 0x4000, scoped, tag = 'input window, operand 0']
    #allocation3 [shape = 's32[2]{0}', space=sflag, size = 0x8, scoped, tag = 'scoped memory for tpu_custom_call.1']
    #allocation4 [shape = 's32[2]{0}', space=sflag, size = 0x8, scoped, tag = 'scoped memory for tpu_custom_call.1']
    #allocation5 [shape = 'u8[98304]{0}', space=vmem, size = 0x18000, scoped, tag = 'input window, operand 1, single buffered']
    #allocation6 [shape = 's32[1]{0}', space=sflag, size = 0x4, scoped, tag = 'scoped memory for tpu_custom_call.1']
    #allocation7 [shape = 'u8[16384]{0}', space=vmem, size = 0x4000, scoped, tag = 'output window, operand 0']
    #allocation8 [shape = 'u8[8192]{0}', space=vmem, size = 0x2000, scoped, tag = 'output window, operand 1']
    #allocation9 [shape = 's32[2]{0}', space=sflag, size = 0x8, scoped, tag = 'scoped memory for tpu_custom_call.1']
    %9 = vsyncpa [#allocation3], 0
    %s10 = scalar_lea.sflag [#allocation3], 1
    %11 = vsyncpa %s10, 0
    %12 = vsyncpa [#allocation6], 0
    %13 = vsyncpa [#allocation4], 0
    %s14 = scalar_lea.sflag [#allocation4], 1
    %15 = vsyncpa %s14, 0
    %16 = vsyncpa [#allocation9], 0
    %s17 = scalar_lea.sflag [#allocation9], 1
    %18 = vsyncpa %s17, 0
    loop: start=0, step=1, limit=4
    $region2: #{tpu_custom_call.1} parent=1 // loop_pre_header
      _
    $region3: #{tpu_custom_call.1} parent=1 // loop_header
      %s20 = sphi 0, %s24
      %p21 = scmp.ge.s32.totalorder %s20, 4
      %s30 = sphi 0, %s32
      %s33 = sphi 0, %s30
      %s34 = sphi 0, %s33
      %s50 = sphi 0, %s34
      %s54 = sphi 0, %s54
      %s56 = sphi 0, %s54
      %s57 = sphi 0, %s56
      %s71 = sphi 0, %s57
      %s77 = sphi 0, %s79
      %s80 = sphi 0, %s77
      %s81 = sphi 0, %s80
      %s97 = sphi 0, %s81
      %s103 = sphi 0, %s105
      %s106 = sphi 0, %s103
      %s107 = sphi 0, %s106
      %s123 = sphi 0, %s107
    $region4: #{tpu_custom_call.1} parent=1 // loop_header_branch
      %23 = sbr.rel (%p21) target = $region8
    $region5: #{tpu_custom_call.1} parent=1 // loop_body
      %s25 = ssub.s32 %s20, 1
      %s26 = ssub.s32 %s20, 2
      %s27 = sadd.s32 %s20, 1
      %s28 = ssub.s32 %s20, %s27
      %p29 = scmp.eq.s32.totalorder %s28, 0
      %s31 = sadd.s32 %s30, 1
      %s32 = scalar_select %p29, %s30, %s31
      %p35 = pneg %p29
      %p36 = scmp.eq.s32.totalorder %s20, 1
      %p37 = por %p35, %p36
      %p38 = scmp.ne.s32.totalorder %s30, %s33
      %p39 = scmp.eq.s32.totalorder %s20, 0
      %p40 = por %p38, %p39
      %p41 = scmp.ne.s32.totalorder %s30, %s33
      %p42 = scmp.eq.s32.totalorder %s25, 1
      %p43 = por %p41, %p42
      %p44 = scmp.ne.s32.totalorder %s33, %s34
      %p45 = scmp.eq.s32.totalorder %s25, 0
      %p46 = por %p44, %p45
      %p47 = scmp.ne.s32.totalorder %s33, %s34
      %p48 = scmp.eq.s32.totalorder %s26, 1
      %p49 = por %p47, %p48
      %p51 = scmp.ne.s32.totalorder %s34, %s50
      %p52 = scmp.eq.s32.totalorder %s26, 0
      %p53 = por %p51, %p52
      %s55 = sadd.s32 %s54, 1
      %p58 = scmp.eq.s32.totalorder %s20, 1
      %p59 = scmp.ne.s32.totalorder %s54, %s56
      %p60 = scmp.eq.s32.totalorder %s20, 0
      %p61 = por %p59, %p60
      %p62 = scmp.ne.s32.totalorder %s54, %s56
      %p63 = scmp.eq.s32.totalorder %s25, 1
      %p64 = por %p62, %p63
      %p65 = scmp.ne.s32.totalorder %s56, %s57
      %p66 = scmp.eq.s32.totalorder %s25, 0
      %p67 = por %p65, %p66
      %p68 = scmp.ne.s32.totalorder %s56, %s57
      %p69 = scmp.eq.s32.totalorder %s26, 1
      %p70 = por %p68, %p69
      %p72 = scmp.ne.s32.totalorder %s57, %s71
      %p73 = scmp.eq.s32.totalorder %s26, 0
      %p74 = por %p72, %p73
      %s75 = ssub.s32 %s20, %s27
      %p76 = scmp.eq.s32.totalorder %s75, 0
      %s78 = sadd.s32 %s77, 1
      %s79 = scalar_select %p76, %s77, %s78
      %p82 = pneg %p76
      %p83 = scmp.eq.s32.totalorder %s20, 1
      %p84 = por %p82, %p83
      %p85 = scmp.ne.s32.totalorder %s77, %s80
      %p86 = scmp.eq.s32.totalorder %s20, 0
      %p87 = por %p85, %p86
      %p88 = scmp.ne.s32.totalorder %s77, %s80
      %p89 = scmp.eq.s32.totalorder %s25, 1
      %p90 = por %p88, %p89
      %p91 = scmp.ne.s32.totalorder %s80, %s81
      %p92 = scmp.eq.s32.totalorder %s25, 0
      %p93 = por %p91, %p92
      %p94 = scmp.ne.s32.totalorder %s80, %s81
      %p95 = scmp.eq.s32.totalorder %s26, 1
      %p96 = por %p94, %p95
      %p98 = scmp.ne.s32.totalorder %s81, %s97
      %p99 = scmp.eq.s32.totalorder %s26, 0
      %p100 = por %p98, %p99
      %s101 = ssub.s32 %s20, %s27
      %p102 = scmp.eq.s32.totalorder %s101, 0
      %s104 = sadd.s32 %s103, 1
      %s105 = scalar_select %p102, %s103, %s104
      %p108 = pneg %p102
      %p109 = scmp.eq.s32.totalorder %s20, 1
      %p110 = por %p108, %p109
      %p111 = scmp.ne.s32.totalorder %s103, %s106
      %p112 = scmp.eq.s32.totalorder %s20, 0
      %p113 = por %p111, %p112
      %p114 = scmp.ne.s32.totalorder %s103, %s106
      %p115 = scmp.eq.s32.totalorder %s25, 1
      %p116 = por %p114, %p115
      %p117 = scmp.ne.s32.totalorder %s106, %s107
      %p118 = scmp.eq.s32.totalorder %s25, 0
      %p119 = por %p117, %p118
      %p120 = scmp.ne.s32.totalorder %s106, %s107
      %p121 = scmp.eq.s32.totalorder %s26, 1
      %p122 = por %p120, %p121
      %p124 = scmp.ne.s32.totalorder %s107, %s123
      %p125 = scmp.eq.s32.totalorder %s26, 0
      %p126 = por %p124, %p125
      %p127 = scmp.le.s32.totalorder 1, %s20
      %p128 = scmp.lt.s32.totalorder %s20, 3
      %p129 = pnand %p127, %p128
      %p130 = pneg %p129
      // Predicated region
      $region9: #{tpu_custom_call.1} parent=5 // pred_check
        _
      $region10: #{tpu_custom_call.1} parent=5 // pred_check_branch
        %132 = sbr.rel (%p129) target = $region12
      $region11: #{tpu_custom_call.1} parent=5 // pred_region
        %s133 = ssub.s32 %s20, 1
        // Predicated region
        $region13: #{tpu_custom_call.1} parent=11 // pred_check
          %p134 = pneg %p67
        $region14: #{tpu_custom_call.1} parent=11 // pred_check_branch
          %136 = sbr.rel (%p134) target = $region16
        $region15: #{tpu_custom_call.1} parent=11 // pred_region
          %s138 = ssub.s32 3072, 3072
          %139 = vsyncadd [#allocation6], %s138
          %s140 = sshll.u32 [#allocation5], 4
          %s141 = int_to_ptr.vmem [resolvable:$true] %s140
          %146 = dma.hbm_to_vmem [thread:$0]  %s1, 3072, %s141, [#allocation6], 64, 64, 4
        $region16: #{tpu_custom_call.1} parent=11 // pred_fallthru
          _
      $region12: #{tpu_custom_call.1} parent=5 // pred_fallthru
        _
      %p147 = scmp.lt.s32.totalorder %s20, 2
      // Predicated region
      $region17: #{tpu_custom_call.1} parent=5 // pred_check
        %p148 = pneg %p147
      $region18: #{tpu_custom_call.1} parent=5 // pred_check_branch
        %150 = sbr.rel (%p148) target = $region20
      $region19: #{tpu_custom_call.1} parent=5 // pred_region
        // Predicated region
        $region21: #{tpu_custom_call.1} parent=19 // pred_check
          %p151 = pneg %p40
        $region22: #{tpu_custom_call.1} parent=19 // pred_check_branch
          %153 = sbr.rel (%p151) target = $region24
        $region23: #{tpu_custom_call.1} parent=19 // pred_region
          %s154 = sand.u32 %s30, 1
          %s155 = scalar_lea.sflag [#allocation3], %s154
          %s156 = sand.u32 %s30, 1
          %s157 = smul.addr %s156, 16
          %s158 = scalar_lea.vmem [#allocation2], %s157
          %s159 = smul.u32 2, %s20
          %s161 = ssub.s32 256, 256
          %162 = vsyncadd %s155, %s161
          %s163 = smul.addr %s159, 128
          %s164 = scalar_lea.hbm %s0, %s163
          %s165 = sshll.u32 %s158, 4
          %s166 = int_to_ptr.vmem [resolvable:$true] %s165
          %171 = dma.hbm_to_vmem [thread:$0]  %s164, 256, %s166, %s155, 128, 128, 8
        $region24: #{tpu_custom_call.1} parent=19 // pred_fallthru
          _
      $region20: #{tpu_custom_call.1} parent=5 // pred_fallthru
        _
      %p172 = scmp.le.s32.totalorder 1, %s20
      %p173 = scmp.lt.s32.totalorder %s20, 3
      %p174 = pnand %p172, %p173
      %p175 = pneg %p174
      // Predicated region
      $region25: #{tpu_custom_call.1} parent=5 // pred_check
        _
      $region26: #{tpu_custom_call.1} parent=5 // pred_check_branch
        %177 = sbr.rel (%p174) target = $region28
      $region27: #{tpu_custom_call.1} parent=5 // pred_region
        %s178 = ssub.s32 %s20, 1
        %s179 = sand.u32 %s33, 1
        %s180 = scalar_lea.sflag [#allocation3], %s179
        %s181 = sand.u32 %s33, 1
        %s182 = smul.addr %s181, 16
        %s183 = scalar_lea.vmem [#allocation2], %s182
        // Predicated region
        $region29: #{tpu_custom_call.1} parent=27 // pred_check
          %p184 = pneg %p46
        $region30: #{tpu_custom_call.1} parent=27 // pred_check_branch
          %186 = sbr.rel (%p184) target = $region32
        $region31: #{tpu_custom_call.1} parent=27 // pred_region
          %187 = dma.done %s180, 256
        $region32: #{tpu_custom_call.1} parent=27 // pred_fallthru
          _
        // Predicated region
        $region33: #{tpu_custom_call.1} parent=27 // pred_check
          %p188 = pneg %p67
        $region34: #{tpu_custom_call.1} parent=27 // pred_check_branch
          %190 = sbr.rel (%p188) target = $region36
        $region35: #{tpu_custom_call.1} parent=27 // pred_region
          %191 = dma.done [#allocation6], 3072
        $region36: #{tpu_custom_call.1} parent=27 // pred_fallthru
          _
        %s192 = sand.u32 %s33, 1
        %s193 = scalar_lea.sflag [#allocation3], %s192
        %s194 = sand.u32 %s33, 1
        %s195 = smul.addr %s194, 16
        %s196 = scalar_lea.vmem [#allocation2], %s195
        %p197 = pneg %p46
        %p198 = pneg %p43
        %p199 = pneg %p67
        %p200 = pneg %p64
        %p201 = pneg %p93
        %p202 = pneg %p90
        %s203 = sand.u32 %s80, 1
        %s204 = scalar_lea.sflag [#allocation4], %s203
        %s205 = sand.u32 %s80, 1
        %s206 = smul.addr %s205, 16
        %s207 = scalar_lea.vmem [#allocation7], %s206
        %p208 = pneg %p119
        %p209 = pneg %p116
        %s210 = sand.u32 %s106, 1
        %s211 = scalar_lea.sflag [#allocation9], %s210
        %s212 = sand.u32 %s106, 1
        %s213 = smul.addr %s212, 8
        %s214 = scalar_lea.vmem [#allocation8], %s213
        %s215 = smul.u32 2, %s25
        %s216 = smul.u32 2, %s25
        %v218 = vld [vmem:[%s183] sm:$0xff]
        %v219 = vld [vmem:[%s183 + $0x8] sm:$0xff]
        %v220 = vlaneseq
        %v221 = vshrl.u32 %v220, 7
        %v222 = vadd.s32 %v221, 8
        %vm223 = vcmp.lt.s32.totalorder %v221, 0
        %v224 = vsub.s32 0, %v221
        %v225 = vsel %vm223, %v224, %v221
        %v226 = vshrl.u32 %v225, 4
        %v227 = vand.u32 %v225, 15
        %v228 = vsub.s32 0, %v227
        %v229 = vsel %vm223, %v228, %v227
        %vm230 = vcmp.lt.s32.totalorder %v222, 0
        %v231 = vsub.s32 0, %v222
        %v232 = vsel %vm230, %v231, %v222
        %v233 = vshrl.u32 %v232, 4
        %v234 = vand.u32 %v232, 15
        %v235 = vsub.s32 0, %v234
        %v236 = vsel %vm230, %v235, %v234
        %vm237 = vcmp.ne.s32.totalorder %v229, 0
        %vm238 = vcmp.ne.s32.totalorder %v236, 0
        %vm239 = vcmp.lt.s32.totalorder %v229, 0
        %vm240 = vcmp.lt.s32.totalorder %v236, 0
        %vm241 = vmand %vm239, %vm237
        %vm242 = vmand %vm240, %vm238
        %v243 = vadd.s32 %v229, 16
        %v244 = vadd.s32 %v236, 16
        %v245 = vsel %vm241, %v243, %v229
        %v246 = vsel %vm242, %v244, %v236
        %vm247 = vcmp.ne.s32.totalorder %v245, 0
        %vm248 = vcmp.ne.s32.totalorder %v246, 0
        %vm249 = vcmp.ne.s32.totalorder %v245, 15
        %vm250 = vcmp.ne.s32.totalorder %v246, 15
        %v251 = vrot.slane %v218, 7
        %v252 = vrot.slane %v219, 7
        %vm253 = vcmp.lt.s32.totalorder %v221, 1
        %v254 = vsel %vm253, %v251, %v252
        %v255 = vsel %vm253, %v252, %v251
        %v256 = vsel %vm247, %v255, 0.0
        %v257 = vsel %vm248, %v254, 0.0
        %v258 = vpack.c.bf16 %v257, %v256
        %v259 = vrot.slane %v218, 1
        %v260 = vrot.slane %v219, 1
        %vm261 = vcmp.lt.s32.totalorder %v221, 7
        %v262 = vsel %vm261, %v259, %v260
        %v263 = vsel %vm261, %v260, %v259
        %v264 = vsel %vm249, %v262, 0.0
        %v265 = vsel %vm250, %v263, 0.0
        %v266 = vpack.c.bf16 %v265, %v264
        %v267 = vpack.c.bf16 %v219, %v218
        %v268 = vld [vmem:[#allocation5] sm:$0xf]
        %v269 = vld [vmem:[#allocation5 + $0x4] sm:$0xf]
        %v270 = vld [vmem:[#allocation5 + $0x8] sm:$0xf]
        %v271 = vld [vmem:[#allocation5 + $0xc] sm:$0xf]
        %v272 = vld [vmem:[#allocation5 + $0x10] sm:$0xf]
        %v273 = vld [vmem:[#allocation5 + $0x14] sm:$0xf]
        %v274 = vld [vmem:[#allocation5 + $0x18] sm:$0xf]
        %v275 = vld [vmem:[#allocation5 + $0x1c] sm:$0xf]
        %v276 = vld [vmem:[#allocation5 + $0x20] sm:$0xf]
        %v277 = vld [vmem:[#allocation5 + $0x24] sm:$0xf]
        %v278 = vld [vmem:[#allocation5 + $0x28] sm:$0xf]
        %v279 = vld [vmem:[#allocation5 + $0x2c] sm:$0xf]
        %v280 = vld [vmem:[#allocation5 + $0x30] sm:$0xf]
        %v281 = vld [vmem:[#allocation5 + $0x34] sm:$0xf]
        %v282 = vld [vmem:[#allocation5 + $0x38] sm:$0xf]
        %v283 = vld [vmem:[#allocation5 + $0x3c] sm:$0xf]
        %v284 = vld [vmem:[#allocation5 + $0x40] sm:$0xf]
        %v285 = vld [vmem:[#allocation5 + $0x44] sm:$0xf]
        %v286 = vld [vmem:[#allocation5 + $0x48] sm:$0xf]
        %v287 = vld [vmem:[#allocation5 + $0x4c] sm:$0xf]
        %v288 = vld [vmem:[#allocation5 + $0x50] sm:$0xf]
        %v289 = vld [vmem:[#allocation5 + $0x54] sm:$0xf]
        %v290 = vld [vmem:[#allocation5 + $0x58] sm:$0xf]
        %v291 = vld [vmem:[#allocation5 + $0x5c] sm:$0xf]
        %v292 = vld [vmem:[#allocation5 + $0x60] sm:$0xf]
        %v293 = vld [vmem:[#allocation5 + $0x64] sm:$0xf]
        %v294 = vld [vmem:[#allocation5 + $0x68] sm:$0xf]
        %v295 = vld [vmem:[#allocation5 + $0x6c] sm:$0xf]
        %v296 = vld [vmem:[#allocation5 + $0x70] sm:$0xf]
        %v297 = vld [vmem:[#allocation5 + $0x74] sm:$0xf]
        %v298 = vld [vmem:[#allocation5 + $0x78] sm:$0xf]
        %v299 = vld [vmem:[#allocation5 + $0x7c] sm:$0xf]
        %v316 = vunpack.c.l.b16 %v284
        %v317 = vunpack.c.l.b16 %v285
        %v318 = vunpack.c.l.b16 %v286
        %v319 = vunpack.c.l.b16 %v287
        %v320 = vunpack.c.l.b16 %v288
        %v321 = vunpack.c.l.b16 %v289
        %v322 = vunpack.c.l.b16 %v290
        %v323 = vunpack.c.l.b16 %v291
        %v324 = vunpack.c.l.b16 %v292
        %v325 = vunpack.c.l.b16 %v293
        %v326 = vunpack.c.l.b16 %v294
        %v327 = vunpack.c.l.b16 %v295
        %v328 = vunpack.c.l.b16 %v296
        %v329 = vunpack.c.l.b16 %v297
        %v330 = vunpack.c.l.b16 %v298
        %v331 = vunpack.c.l.b16 %v299
        %v332 = vpack.c.b16 %v317, %v316
        %v333 = vpack.c.b16 %v319, %v318
        %v334 = vpack.c.b16 %v321, %v320
        %v335 = vpack.c.b16 %v323, %v322
        %v336 = vpack.c.b16 %v325, %v324
        %v337 = vpack.c.b16 %v327, %v326
        %v338 = vpack.c.b16 %v329, %v328
        %v339 = vpack.c.b16 %v331, %v330
        %348 = vmatprep.subr.bf16.mxu0 0
        %349 = vmatpush1.bf16.msra.mxu0 %v339
        %350 = vmatprep.subr.bf16.mxu0 0
        %351 = vmatpush1.bf16.msra.mxu0 %v338
        %352 = vmatprep.subr.bf16.mxu0 0
        %353 = vmatpush1.bf16.msra.mxu0 %v337
        %354 = vmatprep.subr.bf16.mxu0 0
        %355 = vmatpush1.bf16.msra.mxu0 %v336
        %356 = vmatprep.subr.bf16.mxu0 0
        %357 = vmatpush1.bf16.msra.mxu0 %v335
        %358 = vmatprep.subr.bf16.mxu0 0
        %359 = vmatpush1.bf16.msra.mxu0 %v334
        %360 = vmatprep.subr.bf16.mxu0 0
        %361 = vmatpush1.bf16.msra.mxu0 %v333
        %362 = vmatprep.subr.bf16.mxu0 0
        %363 = vmatpush1.bf16.msra.mxu0 %v332
        %364 = vmatprep.subr.bf16.mxu0 0
        %365 = vmatpush2.bf16.msra.mxu0 0
        %366 = vmatprep.subr.bf16.mxu0 0
        %367 = vmatpush2.bf16.msra.mxu0 0
        %368 = vmatprep.subr.bf16.mxu0 0
        %369 = vmatpush2.bf16.msra.mxu0 0
        %370 = vmatprep.subr.bf16.mxu0 0
        %371 = vmatpush2.bf16.msra.mxu0 0
        %372 = vmatprep.subr.bf16.mxu0 0
        %373 = vmatpush2.bf16.msra.mxu0 0
        %374 = vmatprep.subr.bf16.mxu0 0
        %375 = vmatpush2.bf16.msra.mxu0 0
        %376 = vmatprep.subr.bf16.mxu0 0
        %377 = vmatpush2.bf16.msra.mxu0 0
        %378 = vmatprep.subr.bf16.mxu0 0
        %379 = vmatpush2.bf16.msra.mxu0 0
        %380 = vmatprep.mubr.bf16.mxu0 0
        %381 = vmatmul.mubr.bf16.gmra.mxu0 %v267
        %v382 = vpop.f32.mrf.mxu0
        %v383 = vadd.f32 0.0, %v382
        %v384 = vpop.f32.mrf.mxu0
        %v385 = vpop.f32.mrf.mxu0
        %v386 = vadd.f32 0.0, %v385
        %v387 = vpop.f32.mrf.mxu0
        %388 = vdwg.mxu0
        %v405 = vunpack.c.l.b16 %v268
        %v406 = vunpack.c.l.b16 %v269
        %v407 = vunpack.c.l.b16 %v270
        %v408 = vunpack.c.l.b16 %v271
        %v409 = vunpack.c.l.b16 %v272
        %v410 = vunpack.c.l.b16 %v273
        %v411 = vunpack.c.l.b16 %v274
        %v412 = vunpack.c.l.b16 %v275
        %v413 = vunpack.c.l.b16 %v276
        %v414 = vunpack.c.l.b16 %v277
        %v415 = vunpack.c.l.b16 %v278
        %v416 = vunpack.c.l.b16 %v279
        %v417 = vunpack.c.l.b16 %v280
        %v418 = vunpack.c.l.b16 %v281
        %v419 = vunpack.c.l.b16 %v282
        %v420 = vunpack.c.l.b16 %v283
        %v421 = vpack.c.b16 %v406, %v405
        %v422 = vpack.c.b16 %v408, %v407
        %v423 = vpack.c.b16 %v410, %v409
        %v424 = vpack.c.b16 %v412, %v411
        %v425 = vpack.c.b16 %v414, %v413
        %v426 = vpack.c.b16 %v416, %v415
        %v427 = vpack.c.b16 %v418, %v417
        %v428 = vpack.c.b16 %v420, %v419
        %437 = vmatprep.subr.bf16.mxu0 0
        %438 = vmatpush1.bf16.msra.mxu0 %v428
        %439 = vmatprep.subr.bf16.mxu0 0
        %440 = vmatpush1.bf16.msra.mxu0 %v427
        %441 = vmatprep.subr.bf16.mxu0 0
        %442 = vmatpush1.bf16.msra.mxu0 %v426
        %443 = vmatprep.subr.bf16.mxu0 0
        %444 = vmatpush1.bf16.msra.mxu0 %v425
        %445 = vmatprep.subr.bf16.mxu0 0
        %446 = vmatpush1.bf16.msra.mxu0 %v424
        %447 = vmatprep.subr.bf16.mxu0 0
        %448 = vmatpush1.bf16.msra.mxu0 %v423
        %449 = vmatprep.subr.bf16.mxu0 0
        %450 = vmatpush1.bf16.msra.mxu0 %v422
        %451 = vmatprep.subr.bf16.mxu0 0
        %452 = vmatpush1.bf16.msra.mxu0 %v421
        %453 = vmatprep.subr.bf16.mxu0 0
        %454 = vmatpush2.bf16.msra.mxu0 0
        %455 = vmatprep.subr.bf16.mxu0 0
        %456 = vmatpush2.bf16.msra.mxu0 0
        %457 = vmatprep.subr.bf16.mxu0 0
        %458 = vmatpush2.bf16.msra.mxu0 0
        %459 = vmatprep.subr.bf16.mxu0 0
        %460 = vmatpush2.bf16.msra.mxu0 0
        %461 = vmatprep.subr.bf16.mxu0 0
        %462 = vmatpush2.bf16.msra.mxu0 0
        %463 = vmatprep.subr.bf16.mxu0 0
        %464 = vmatpush2.bf16.msra.mxu0 0
        %465 = vmatprep.subr.bf16.mxu0 0
        %466 = vmatpush2.bf16.msra.mxu0 0
        %467 = vmatprep.subr.bf16.mxu0 0
        %468 = vmatpush2.bf16.msra.mxu0 0
        %469 = vmatprep.mubr.bf16.mxu0 0
        %470 = vmatmul.mubr.bf16.gmra.mxu0 %v258
        %v471 = vpop.f32.mrf.mxu0
        %v472 = vadd.f32 %v383, %v471
        %v473 = vpop.f32.mrf.mxu0
        %v474 = vpop.f32.mrf.mxu0
        %v475 = vadd.f32 %v386, %v474
        %v476 = vpop.f32.mrf.mxu0
        %477 = vdwg.mxu0
        %v478 = vld [vmem:[#allocation5 + $0x80] sm:$0xf]
        %v479 = vld [vmem:[#allocation5 + $0x84] sm:$0xf]
        %v480 = vld [vmem:[#allocation5 + $0x88] sm:$0xf]
        %v481 = vld [vmem:[#allocation5 + $0x8c] sm:$0xf]
        %v482 = vld [vmem:[#allocation5 + $0x90] sm:$0xf]
        %v483 = vld [vmem:[#allocation5 + $0x94] sm:$0xf]
        %v484 = vld [vmem:[#allocation5 + $0x98] sm:$0xf]
        %v485 = vld [vmem:[#allocation5 + $0x9c] sm:$0xf]
        %v486 = vld [vmem:[#allocation5 + $0xa0] sm:$0xf]
        %v487 = vld [vmem:[#allocation5 + $0xa4] sm:$0xf]
        %v488 = vld [vmem:[#allocation5 + $0xa8] sm:$0xf]
        %v489 = vld [vmem:[#allocation5 + $0xac] sm:$0xf]
        %v490 = vld [vmem:[#allocation5 + $0xb0] sm:$0xf]
        %v491 = vld [vmem:[#allocation5 + $0xb4] sm:$0xf]
        %v492 = vld [vmem:[#allocation5 + $0xb8] sm:$0xf]
        %v493 = vld [vmem:[#allocation5 + $0xbc] sm:$0xf]
        %v510 = vunpack.c.l.b16 %v478
        %v511 = vunpack.c.l.b16 %v479
        %v512 = vunpack.c.l.b16 %v480
        %v513 = vunpack.c.l.b16 %v481
        %v514 = vunpack.c.l.b16 %v482
        %v515 = vunpack.c.l.b16 %v483
        %v516 = vunpack.c.l.b16 %v484
        %v517 = vunpack.c.l.b16 %v485
        %v518 = vunpack.c.l.b16 %v486
        %v519 = vunpack.c.l.b16 %v487
        %v520 = vunpack.c.l.b16 %v488
        %v521 = vunpack.c.l.b16 %v489
        %v522 = vunpack.c.l.b16 %v490
        %v523 = vunpack.c.l.b16 %v491
        %v524 = vunpack.c.l.b16 %v492
        %v525 = vunpack.c.l.b16 %v493
        %v526 = vpack.c.b16 %v511, %v510
        %v527 = vpack.c.b16 %v513, %v512
        %v528 = vpack.c.b16 %v515, %v514
        %v529 = vpack.c.b16 %v517, %v516
        %v530 = vpack.c.b16 %v519, %v518
        %v531 = vpack.c.b16 %v521, %v520
        %v532 = vpack.c.b16 %v523, %v522
        %v533 = vpack.c.b16 %v525, %v524
        %542 = vmatprep.subr.bf16.mxu0 0
        %543 = vmatpush1.bf16.msra.mxu0 %v533
        %544 = vmatprep.subr.bf16.mxu0 0
        %545 = vmatpush1.bf16.msra.mxu0 %v532
        %546 = vmatprep.subr.bf16.mxu0 0
        %547 = vmatpush1.bf16.msra.mxu0 %v531
        %548 = vmatprep.subr.bf16.mxu0 0
        %549 = vmatpush1.bf16.msra.mxu0 %v530
        %550 = vmatprep.subr.bf16.mxu0 0
        %551 = vmatpush1.bf16.msra.mxu0 %v529
        %552 = vmatprep.subr.bf16.mxu0 0
        %553 = vmatpush1.bf16.msra.mxu0 %v528
        %554 = vmatprep.subr.bf16.mxu0 0
        %555 = vmatpush1.bf16.msra.mxu0 %v527
        %556 = vmatprep.subr.bf16.mxu0 0
        %557 = vmatpush1.bf16.msra.mxu0 %v526
        %558 = vmatprep.subr.bf16.mxu0 0
        %559 = vmatpush2.bf16.msra.mxu0 0
        %560 = vmatprep.subr.bf16.mxu0 0
        %561 = vmatpush2.bf16.msra.mxu0 0
        %562 = vmatprep.subr.bf16.mxu0 0
        %563 = vmatpush2.bf16.msra.mxu0 0
        %564 = vmatprep.subr.bf16.mxu0 0
        %565 = vmatpush2.bf16.msra.mxu0 0
        %566 = vmatprep.subr.bf16.mxu0 0
        %567 = vmatpush2.bf16.msra.mxu0 0
        %568 = vmatprep.subr.bf16.mxu0 0
        %569 = vmatpush2.bf16.msra.mxu0 0
        %570 = vmatprep.subr.bf16.mxu0 0
        %571 = vmatpush2.bf16.msra.mxu0 0
        %572 = vmatprep.subr.bf16.mxu0 0
        %573 = vmatpush2.bf16.msra.mxu0 0
        %574 = vmatprep.mubr.bf16.mxu0 0
        %575 = vmatmul.mubr.bf16.gmra.mxu0 %v266
        %v576 = vpop.f32.mrf.mxu0
        %v577 = vadd.f32 0.0, %v576
        %v578 = vpop.f32.mrf.mxu0
        %v579 = vpop.f32.mrf.mxu0
        %v580 = vadd.f32 0.0, %v579
        %v581 = vpop.f32.mrf.mxu0
        %582 = vdwg.mxu0
        %v583 = vadd.f32 %v472, %v577
        %v584 = vadd.f32 %v475, %v580
        %585 = vst [vmem:[%s207] sm:$0xff] %v583
        %586 = vst [vmem:[%s207 + $0x8] sm:$0xff] %v584
        %v587 = vadd.f32 %v583, %v584
        %v588 = vrot.slane %v587, 4
        %v589 = vadd.f32 %v587, %v588
        %v590 = vrot.slane %v589, 2
        %v591 = vadd.f32 %v589, %v590
        %v592 = vrot.slane %v591, 1
        %v593 = vadd.f32 %v591, %v592
        %v594 = vmul.f32 %v583, %v583
        %v595 = vmul.f32 %v584, %v584
        %v596 = vadd.f32 %v594, %v595
        %v597 = vrot.slane %v596, 4
        %v598 = vadd.f32 %v596, %v597
        %v599 = vrot.slane %v598, 2
        %v600 = vadd.f32 %v598, %v599
        %v601 = vrot.slane %v600, 1
        %v602 = vadd.f32 %v600, %v601
        %vm603 = vcmask 1040384
        %v604 = vsel %vm603, %v593, %v602
        %vm605 = vcmask 1041408
        %v606 = vsel %vm605, %v604, 0.0
        %607 = vst [vmem:[%s214] sm:$0xff] %v606
        %s608 = sand.u32 %s80, 1
        %s609 = scalar_lea.sflag [#allocation4], %s608
        %s610 = sand.u32 %s80, 1
        %s611 = smul.addr %s610, 16
        %s612 = scalar_lea.vmem [#allocation7], %s611
        %s613 = sand.u32 %s106, 1
        %s614 = scalar_lea.sflag [#allocation9], %s613
        %s615 = sand.u32 %s106, 1
        %s616 = smul.addr %s615, 8
        %s617 = scalar_lea.vmem [#allocation8], %s616
        // Predicated region
        $region37: #{tpu_custom_call.1} parent=27 // pred_check
          %p618 = pneg %p90
        $region38: #{tpu_custom_call.1} parent=27 // pred_check_branch
          %620 = sbr.rel (%p618) target = $region40
        $region39: #{tpu_custom_call.1} parent=27 // pred_region
          %s621 = smul.u32 2, %s25
          %s623 = ssub.s32 256, 256
          %624 = vsyncadd %s609, %s623
          %s625 = smul.addr %s621, 128
          %s626 = scalar_lea.hbm %s2, %s625
          %s627 = sshll.u32 %s612, 4
          %s628 = int_to_ptr.vmem [resolvable:$true] %s627
          %633 = dma.vmem_to_hbm [thread:$0]  %s628, 256, %s626, %s609, 128, 128, 8
        $region40: #{tpu_custom_call.1} parent=27 // pred_fallthru
          _
        // Predicated region
        $region41: #{tpu_custom_call.1} parent=27 // pred_check
          %p634 = pneg %p116
        $region42: #{tpu_custom_call.1} parent=27 // pred_check_branch
          %636 = sbr.rel (%p634) target = $region44
        $region43: #{tpu_custom_call.1} parent=27 // pred_region
          %s638 = ssub.s32 128, 128
          %639 = vsyncadd %s614, %s638
          %s640 = smul.addr %s25, 128
          %s641 = scalar_lea.hbm %s3, %s640
          %s643 = sshll.u32 %s617, 4
          %s644 = int_to_ptr.vmem [resolvable:$true] %s643
          %646 = dma.vmem_to_hbm [thread:$0]  %s644, 128, %s641, %s614
        $region44: #{tpu_custom_call.1} parent=27 // pred_fallthru
          _
      $region28: #{tpu_custom_call.1} parent=5 // pred_fallthru
        _
      %p647 = scmp.le.s32.totalorder 2, %s20
      // Predicated region
      $region45: #{tpu_custom_call.1} parent=5 // pred_check
        %p648 = pneg %p647
      $region46: #{tpu_custom_call.1} parent=5 // pred_check_branch
        %650 = sbr.rel (%p648) target = $region48
      $region47: #{tpu_custom_call.1} parent=5 // pred_region
        %s651 = ssub.s32 %s20, 2
        // Predicated region
        $region49: #{tpu_custom_call.1} parent=47 // pred_check
          %p652 = pneg %p96
        $region50: #{tpu_custom_call.1} parent=47 // pred_check_branch
          %654 = sbr.rel (%p652) target = $region52
        $region51: #{tpu_custom_call.1} parent=47 // pred_region
          %s655 = sand.u32 %s81, 1
          %s656 = scalar_lea.sflag [#allocation4], %s655
          %s657 = sand.u32 %s81, 1
          %s658 = smul.addr %s657, 16
          %s659 = scalar_lea.vmem [#allocation7], %s658
          %660 = dma.done %s656, 256
        $region52: #{tpu_custom_call.1} parent=47 // pred_fallthru
          _
        // Predicated region
        $region53: #{tpu_custom_call.1} parent=47 // pred_check
          %p661 = pneg %p122
        $region54: #{tpu_custom_call.1} parent=47 // pred_check_branch
          %663 = sbr.rel (%p661) target = $region56
        $region55: #{tpu_custom_call.1} parent=47 // pred_region
          %s664 = sand.u32 %s107, 1
          %s665 = scalar_lea.sflag [#allocation9], %s664
          %s666 = sand.u32 %s107, 1
          %s667 = smul.addr %s666, 8
          %s668 = scalar_lea.vmem [#allocation8], %s667
          %669 = dma.done %s665, 128
        $region56: #{tpu_custom_call.1} parent=47 // pred_fallthru
          _
      $region48: #{tpu_custom_call.1} parent=5 // pred_fallthru
        _
    $region6: #{tpu_custom_call.1} parent=1 // loop_footer
      %s24 = sadd.s32 1, %s20
    $region7: #{tpu_custom_call.1} parent=1 // loop_footer_branch
      %19 = sbr.rel target = $region3
    $region8: #{tpu_custom_call.1} parent=1 // loop_exit
      _
    %670 = vsyncpa [#allocation3], 1
    %s671 = scalar_lea.sflag [#allocation3], 1
    %672 = vsyncpa %s671, 1
    %673 = vsyncpa [#allocation6], 1
    %674 = vsyncpa [#allocation4], 1
    %s675 = scalar_lea.sflag [#allocation4], 1
    %676 = vsyncpa %s675, 1
    %677 = vsyncpa [#allocation9], 1
    %s678 = scalar_lea.sflag [#allocation9], 1
    %679 = vsyncpa %s678, 1

</llo_original>
